<compile_context>
chip_gen: v7x
topology: tpu7x:2x2x1
jax: 0.10.0
libtpu: 0.0.40
codegen_flags: <defaults>
</compile_context>

<pallas_src>
import functools
import math

import jax
import jax.numpy as jnp
from jax.experimental import pallas as pl
from jax.experimental.pallas import tpu as pltpu

EPS = 1e-6
LANES = 128


# --------------------------------------------------------------------------- #
# Kernels
# --------------------------------------------------------------------------- #
def _layernorm_rows_kernel(alpha_ref, bias_ref, x_ref, o_ref, *, d):
    """General path: one normalization group per row; tile = (TM, D)."""
    x = x_ref[...].astype(jnp.float32)
    mean = jnp.mean(x, axis=-1, keepdims=True)
    diff = x - mean
    # torch.std default is the unbiased estimator (ddof = 1); eps added to std.
    denom = max(d - 1, 1)  # TODO(synk): d_model == 1 is NaN in torch; guarded here.
    var = jnp.sum(diff * diff, axis=-1, keepdims=True) * (1.0 / denom)
    std = jnp.sqrt(var)
    # Exact divide on the (TM, 1) column; the approximate EUP reciprocal was the
    # source of the previous correctness failure and buys nothing here (mem-bound).
    inv = alpha_ref[0] / (std + EPS)
    o_ref[...] = (diff * inv + bias_ref[0]).astype(o_ref.dtype)


def _layernorm_packed_kernel(alpha_ref, bias_ref, x_ref, o_ref, *, d, k):
    """Tiny-D path: each 128-lane row packs k = 128 // d logical rows.

    Per-segment statistics use static lane slices (exact f32 reductions); the
    result is re-assembled with one lane-axis concatenate so the store is a
    single full-width, unmasked vst.
    """
    x = x_ref[...].astype(jnp.float32)          # (TM, k*d)
    alpha = alpha_ref[0]
    bias = bias_ref[0]
    denom = max(d - 1, 1)
    pieces = []
    for g in range(k):                          # small static loop (k <= 16)
        xg = x[:, g * d:(g + 1) * d]            # (TM, d) lane slice
        mean = jnp.mean(xg, axis=-1, keepdims=True)
        diff = xg - mean
        var = jnp.sum(diff * diff, axis=-1, keepdims=True) * (1.0 / denom)
        inv = alpha / (jnp.sqrt(var) + EPS)
        pieces.append(diff * inv + bias)
    o_ref[...] = jnp.concatenate(pieces, axis=-1).astype(o_ref.dtype)


# --------------------------------------------------------------------------- #
# Tiling helpers
# --------------------------------------------------------------------------- #
def _round_up(n, m):
    return ((n + m - 1) // m) * m


def _sublane_multiple(dtype):
    # Sub-32-bit dtypes pack along sublanes: native tiles are (8,128) f32,
    # (16,128) bf16, (32,128) int8/fp8.
    itemsize = jnp.dtype(dtype).itemsize
    return {4: 8, 2: 16, 1: 32}.get(itemsize, 8)


def _vmem_config():
    # (tile_budget, vmem_limit): tile_budget bounds 4 * TM * D * itemsize
    # (double-buffered in + out tiles); vmem_limit is passed to the compiler so
    # v5e's 16 MiB scoped default does not bite, while staying well inside the
    # physical VMEM of every generation.
    try:
        cap = pltpu.get_tpu_info().vmem_capacity_bytes
    except Exception:  # not on TPU / interpret mode -> be conservative
        cap = 64 * 1024 * 1024
    if cap >= 128 * 1024 * 1024:          # v5e / v6e: 128 MiB physical
        return 16 * 1024 * 1024, 64 * 1024 * 1024
    return 8 * 1024 * 1024, 32 * 1024 * 1024   # v7x: 64 MiB per TensorCore


def _pick_block_rows(rows, d, itemsize, sub, tile_budget):
    if rows <= sub:
        return rows                        # one block == the whole (tiny) array
    tm = tile_budget // (4 * d * itemsize)
    tm = min(tm, 8192, _round_up(rows, sub))
    tm = max(sub, (tm // sub) * sub)
    return tm


# --------------------------------------------------------------------------- #
# Wrapper
# --------------------------------------------------------------------------- #
def pallas_layernorm(x, alpha, bias):
    """LayerNormalization (scalar alpha/bias, unbiased std) over the last axis."""
    orig_shape = x.shape
    D = orig_shape[-1]
    rows = math.prod(orig_shape[:-1]) if len(orig_shape) > 1 else 1

    alpha = jnp.asarray(alpha, dtype=jnp.float32).reshape(1)
    bias = jnp.asarray(bias, dtype=jnp.float32).reshape(1)

    tile_budget, vmem_limit = _vmem_config()
    sub = _sublane_multiple(x.dtype)
    itemsize = jnp.dtype(x.dtype).itemsize

    packable = (8 <= D < LANES) and (LANES % D == 0) and (rows % (LANES // D) == 0)

    if packable:
        # Lane-dense layout for tiny d_model: pack k rows per 128-lane slab.
        k = LANES // D
        prows = rows // k
        x2 = x.reshape(prows, k * D)       # contiguous -> free reshape
        tm = _pick_block_rows(prows, k * D, itemsize, sub, tile_budget)
        out = pl.pallas_call(
            functools.partial(_layernorm_packed_kernel, d=D, k=k),
            out_shape=jax.ShapeDtypeStruct((prows, k * D), x.dtype),
            grid=(pl.cdiv(prows, tm),),    # ragged grid: no host-side pad/slice
            in_specs=[
                pl.BlockSpec(memory_space=pltpu.SMEM),        # alpha (scalar)
                pl.BlockSpec(memory_space=pltpu.SMEM),        # bias  (scalar)
                pl.BlockSpec((tm, k * D), lambda i: (i, 0)),  # packed row tile
            ],
            out_specs=pl.BlockSpec((tm, k * D), lambda i: (i, 0)),
            compiler_params=pltpu.CompilerParams(
                dimension_semantics=("parallel",),
                vmem_limit_bytes=vmem_limit),
        )(alpha, bias, x2)
        return out.reshape(orig_shape)

    # General path: whole d_model on the lane axis, row tiles on the grid.
    x2 = x.reshape(rows, D)
    tm = _pick_block_rows(rows, D, itemsize, sub, tile_budget)
    out = pl.pallas_call(
        functools.partial(_layernorm_rows_kernel, d=D),
        out_shape=jax.ShapeDtypeStruct((rows, D), x.dtype),
        grid=(pl.cdiv(rows, tm),),         # ragged grid: no host-side pad/slice
        in_specs=[
            pl.BlockSpec(memory_space=pltpu.SMEM),        # alpha (scalar)
            pl.BlockSpec(memory_space=pltpu.SMEM),        # bias  (scalar)
            pl.BlockSpec((tm, D), lambda i: (i, 0)),      # x row tile
        ],
        out_specs=pl.BlockSpec((tm, D), lambda i: (i, 0)),
        compiler_params=pltpu.CompilerParams(
            dimension_semantics=("parallel",),
            vmem_limit_bytes=vmem_limit),
    )(alpha, bias, x2)
    return out.reshape(orig_shape)


def encoder_forward(x, mask, layers, alpha, bias):
    # Apply each encoder layer (empty list here -> identity), then the norm.
    for layer in layers:
        x = layer(x, mask)
    return pallas_layernorm(x, alpha, bias)


# --------------------------------------------------------------------------- #
# Demo / self-check
# --------------------------------------------------------------------------- #
if __name__ == "__main__":
    key = jax.random.PRNGKey(0)
    k1, k2 = jax.random.split(key)

    # Deterministic parameter init matching the module's __init__:
    alpha = jnp.ones((1,), dtype=jnp.float32)    # nn.Parameter(torch.ones(1))
    bias = jnp.zeros((1,), dtype=jnp.float32)    # nn.Parameter(torch.zeros(1))
    layers = []                                  # empty ModuleList equivalent

    def ref_norm(x):
        mean = jnp.mean(x, axis=-1, keepdims=True)
        std = jnp.std(x, axis=-1, keepdims=True, ddof=1)   # torch unbiased std
        return alpha[0] * (x - mean) / (std + EPS) + bias[0]

    # Case 1: tiny d_model (exercises the lane-packed path).
    B, S, D = 2, 8, 32
    x_small = jax.random.normal(k1, (B, S, D), dtype=jnp.float32)
    mask = jnp.ones((B, 1, 1, S), dtype=jnp.float32)        # unused by the norm
    out_small = jax.block_until_ready(
        encoder_forward(x_small, mask, layers, alpha, bias))
    err1 = float(jnp.max(jnp.abs(out_small - ref_norm(x_small))))
    assert jnp.allclose(out_small, ref_norm(x_small), atol=1e-3, rtol=1e-3), err1

    # Case 2: d_model >= 128 (exercises the general row-tile path).
    x_wide = jax.random.normal(k2, (B, S, 128), dtype=jnp.float32)
    out_wide = jax.block_until_ready(
        encoder_forward(x_wide, mask, layers, alpha, bias))
    err2 = float(jnp.max(jnp.abs(out_wide - ref_norm(x_wide))))
    assert jnp.allclose(out_wide, ref_norm(x_wide), atol=1e-3, rtol=1e-3), err2

    print("KERNEL_OK")
</pallas_src>

<mosaic_0001>
module attributes {stable_mosaic.version = 11 : i64} {
  func.func @_layernorm_packed_kernel(%arg0: i32, %arg1: memref<1xf32, #tpu.memory_space<smem>>, %arg2: memref<1xf32, #tpu.memory_space<smem>>, %arg3: memref<4x128xf32, #tpu.memory_space<vmem>>, %arg4: memref<4x128xf32, #tpu.memory_space<vmem>>) attributes {dimension_semantics = [#tpu.dimension_semantics<parallel>], iteration_bounds = array<i64: 1>, scalar_prefetch = 0 : i64, scratch_operands = 0 : i64, tpu.core_type = #tpu.core_type<tc>, window_params = [{transform_indices = @transform_0, window_bounds = array<i64: 1>}, {transform_indices = @transform_1, window_bounds = array<i64: 1>}, {transform_indices = @transform_2, window_bounds = array<i64: 4, 128>}, {transform_indices = @transform_3, window_bounds = array<i64: 4, 128>}]} {
    %c0 = arith.constant 0 : index
    %c0_0 = arith.constant 0 : index
    %0 = vector.load %arg3[%c0, %c0_0] : memref<4x128xf32, #tpu.memory_space<vmem>>, vector<4x128xf32>
    %c0_1 = arith.constant 0 : index
    %1 = memref.load %arg1[%c0_1] : memref<1xf32, #tpu.memory_space<smem>>
    %c0_2 = arith.constant 0 : index
    %2 = memref.load %arg2[%c0_2] : memref<1xf32, #tpu.memory_space<smem>>
    %3 = vector.extract_strided_slice %0 {offsets = [0, 0], sizes = [4, 32], strides = [1, 1]} : vector<4x128xf32> to vector<4x32xf32>
    %cst = arith.constant dense<0.000000e+00> : vector<4xf32>
    %4 = vector.multi_reduction <add>, %3, %cst [1] : vector<4x32xf32> to vector<4xf32>
    %5 = vector.shape_cast %4 : vector<4xf32> to vector<4x1xf32>
    %cst_3 = arith.constant 3.200000e+01 : f32
    %6 = vector.broadcast %cst_3 : f32 to vector<4x1xf32>
    %7 = arith.divf %5, %6 : vector<4x1xf32>
    %8 = vector.broadcast %7 : vector<4x1xf32> to vector<4x32xf32>
    %9 = arith.subf %3, %8 : vector<4x32xf32>
    %10 = arith.mulf %9, %9 : vector<4x32xf32>
    %cst_4 = arith.constant dense<0.000000e+00> : vector<4xf32>
    %11 = vector.multi_reduction <add>, %10, %cst_4 [1] : vector<4x32xf32> to vector<4xf32>
    %12 = vector.shape_cast %11 : vector<4xf32> to vector<4x1xf32>
    %cst_5 = arith.constant 0.0322580636 : f32
    %13 = vector.broadcast %cst_5 : f32 to vector<4x1xf32>
    %14 = arith.mulf %12, %13 : vector<4x1xf32>
    %15 = math.sqrt %14 : vector<4x1xf32>
    %cst_6 = arith.constant 9.99999997E-7 : f32
    %16 = vector.broadcast %cst_6 : f32 to vector<4x1xf32>
    %17 = arith.addf %15, %16 : vector<4x1xf32>
    %18 = vector.broadcast %1 : f32 to vector<4x1xf32>
    %19 = arith.divf %18, %17 : vector<4x1xf32>
    %20 = vector.broadcast %19 : vector<4x1xf32> to vector<4x32xf32>
    %21 = arith.mulf %9, %20 : vector<4x32xf32>
    %22 = vector.broadcast %2 : f32 to vector<4x32xf32>
    %23 = arith.addf %21, %22 : vector<4x32xf32>
    %24 = vector.extract_strided_slice %0 {offsets = [0, 32], sizes = [4, 32], strides = [1, 1]} : vector<4x128xf32> to vector<4x32xf32>
    %cst_7 = arith.constant dense<0.000000e+00> : vector<4xf32>
    %25 = vector.multi_reduction <add>, %24, %cst_7 [1] : vector<4x32xf32> to vector<4xf32>
    %26 = vector.shape_cast %25 : vector<4xf32> to vector<4x1xf32>
    %cst_8 = arith.constant 3.200000e+01 : f32
    %27 = vector.broadcast %cst_8 : f32 to vector<4x1xf32>
    %28 = arith.divf %26, %27 : vector<4x1xf32>
    %29 = vector.broadcast %28 : vector<4x1xf32> to vector<4x32xf32>
    %30 = arith.subf %24, %29 : vector<4x32xf32>
    %31 = arith.mulf %30, %30 : vector<4x32xf32>
    %cst_9 = arith.constant dense<0.000000e+00> : vector<4xf32>
    %32 = vector.multi_reduction <add>, %31, %cst_9 [1] : vector<4x32xf32> to vector<4xf32>
    %33 = vector.shape_cast %32 : vector<4xf32> to vector<4x1xf32>
    %cst_10 = arith.constant 0.0322580636 : f32
    %34 = vector.broadcast %cst_10 : f32 to vector<4x1xf32>
    %35 = arith.mulf %33, %34 : vector<4x1xf32>
    %36 = math.sqrt %35 : vector<4x1xf32>
    %cst_11 = arith.constant 9.99999997E-7 : f32
    %37 = vector.broadcast %cst_11 : f32 to vector<4x1xf32>
    %38 = arith.addf %36, %37 : vector<4x1xf32>
    %39 = vector.broadcast %1 : f32 to vector<4x1xf32>
    %40 = arith.divf %39, %38 : vector<4x1xf32>
    %41 = vector.broadcast %40 : vector<4x1xf32> to vector<4x32xf32>
    %42 = arith.mulf %30, %41 : vector<4x32xf32>
    %43 = vector.broadcast %2 : f32 to vector<4x32xf32>
    %44 = arith.addf %42, %43 : vector<4x32xf32>
    %45 = vector.extract_strided_slice %0 {offsets = [0, 64], sizes = [4, 32], strides = [1, 1]} : vector<4x128xf32> to vector<4x32xf32>
    %cst_12 = arith.constant dense<0.000000e+00> : vector<4xf32>
    %46 = vector.multi_reduction <add>, %45, %cst_12 [1] : vector<4x32xf32> to vector<4xf32>
    %47 = vector.shape_cast %46 : vector<4xf32> to vector<4x1xf32>
    %cst_13 = arith.constant 3.200000e+01 : f32
    %48 = vector.broadcast %cst_13 : f32 to vector<4x1xf32>
    %49 = arith.divf %47, %48 : vector<4x1xf32>
    %50 = vector.broadcast %49 : vector<4x1xf32> to vector<4x32xf32>
    %51 = arith.subf %45, %50 : vector<4x32xf32>
    %52 = arith.mulf %51, %51 : vector<4x32xf32>
    %cst_14 = arith.constant dense<0.000000e+00> : vector<4xf32>
    %53 = vector.multi_reduction <add>, %52, %cst_14 [1] : vector<4x32xf32> to vector<4xf32>
    %54 = vector.shape_cast %53 : vector<4xf32> to vector<4x1xf32>
    %cst_15 = arith.constant 0.0322580636 : f32
    %55 = vector.broadcast %cst_15 : f32 to vector<4x1xf32>
    %56 = arith.mulf %54, %55 : vector<4x1xf32>
    %57 = math.sqrt %56 : vector<4x1xf32>
    %cst_16 = arith.constant 9.99999997E-7 : f32
    %58 = vector.broadcast %cst_16 : f32 to vector<4x1xf32>
    %59 = arith.addf %57, %58 : vector<4x1xf32>
    %60 = vector.broadcast %1 : f32 to vector<4x1xf32>
    %61 = arith.divf %60, %59 : vector<4x1xf32>
    %62 = vector.broadcast %61 : vector<4x1xf32> to vector<4x32xf32>
    %63 = arith.mulf %51, %62 : vector<4x32xf32>
    %64 = vector.broadcast %2 : f32 to vector<4x32xf32>
    %65 = arith.addf %63, %64 : vector<4x32xf32>
    %66 = vector.extract_strided_slice %0 {offsets = [0, 96], sizes = [4, 32], strides = [1, 1]} : vector<4x128xf32> to vector<4x32xf32>
    %cst_17 = arith.constant dense<0.000000e+00> : vector<4xf32>
    %67 = vector.multi_reduction <add>, %66, %cst_17 [1] : vector<4x32xf32> to vector<4xf32>
    %68 = vector.shape_cast %67 : vector<4xf32> to vector<4x1xf32>
    %cst_18 = arith.constant 3.200000e+01 : f32
    %69 = vector.broadcast %cst_18 : f32 to vector<4x1xf32>
    %70 = arith.divf %68, %69 : vector<4x1xf32>
    %71 = vector.broadcast %70 : vector<4x1xf32> to vector<4x32xf32>
    %72 = arith.subf %66, %71 : vector<4x32xf32>
    %73 = arith.mulf %72, %72 : vector<4x32xf32>
    %cst_19 = arith.constant dense<0.000000e+00> : vector<4xf32>
    %74 = vector.multi_reduction <add>, %73, %cst_19 [1] : vector<4x32xf32> to vector<4xf32>
    %75 = vector.shape_cast %74 : vector<4xf32> to vector<4x1xf32>
    %cst_20 = arith.constant 0.0322580636 : f32
    %76 = vector.broadcast %cst_20 : f32 to vector<4x1xf32>
    %77 = arith.mulf %75, %76 : vector<4x1xf32>
    %78 = math.sqrt %77 : vector<4x1xf32>
    %cst_21 = arith.constant 9.99999997E-7 : f32
    %79 = vector.broadcast %cst_21 : f32 to vector<4x1xf32>
    %80 = arith.addf %78, %79 : vector<4x1xf32>
    %81 = vector.broadcast %1 : f32 to vector<4x1xf32>
    %82 = arith.divf %81, %80 : vector<4x1xf32>
    %83 = vector.broadcast %82 : vector<4x1xf32> to vector<4x32xf32>
    %84 = arith.mulf %72, %83 : vector<4x32xf32>
    %85 = vector.broadcast %2 : f32 to vector<4x32xf32>
    %86 = arith.addf %84, %85 : vector<4x32xf32>
    %87 = tpu.concatenate %23, %44, %65, %86 in 1 : vector<4x32xf32>, vector<4x32xf32>, vector<4x32xf32>, vector<4x32xf32> -> vector<4x128xf32>
    %c0_22 = arith.constant 0 : index
    %c0_23 = arith.constant 0 : index
    %88 = vector.load %arg4[%c0_22, %c0_23] : memref<4x128xf32, #tpu.memory_space<vmem>>, vector<4x128xf32>
    tpu.vector_store %arg4[%c0_22, %c0_23], %87 {strides = array<i32>} : memref<4x128xf32, #tpu.memory_space<vmem>>, vector<4x128xf32>,
    return
  }
  func.func @transform_0(%arg0: i32) -> i32 {
    %c0_i32 = arith.constant 0 : i32
    %c0_i32_0 = arith.constant 0 : i32
    return %c0_i32 : i32
  }
  func.func @transform_1(%arg0: i32) -> i32 {
    %c0_i32 = arith.constant 0 : i32
    %c0_i32_0 = arith.constant 0 : i32
    return %c0_i32 : i32
  }
  func.func @transform_2(%arg0: i32) -> (i32, i32) {
    %c0_i32 = arith.constant 0 : i32
    %c0_i32_0 = arith.constant 0 : i32
    return %arg0, %c0_i32 : i32, i32
  }
  func.func @transform_3(%arg0: i32) -> (i32, i32) {
    %c0_i32 = arith.constant 0 : i32
    %c0_i32_0 = arith.constant 0 : i32
    return %arg0, %c0_i32 : i32, i32
  }
}

</mosaic_0001>

<llo_original>
// kernel: tpu_custom_call.1
$region0: #{tpu_custom_call.1}
  #allocation0 [shape = 'u32[]', space=smem, size = 0x4, offset = 0x4, fixed_abs, tag = 'smem constant byte address 0x4 - core index']
  #allocation1 [shape = 'u32[144,128]{1,0:T(1,128)}', space=vmem, size = 0x12000, scoped, tag = 'internal scratch']
  #allocation2 [shape = 'f32[1]{0:T(128)S(6)}', space=smem, size = 0x200, scoped, tag = 'scoped memory for tpu_custom_call.1']
  #allocation3 [shape = 'f32[1]{0:T(128)S(6)}', space=smem, size = 0x200, scoped, tag = 'scoped memory for tpu_custom_call.1']
  %s0 = inlined_call_operand.<no memory space> [shape: f32[1], index: 0, kind: input, shape index: {}]
  %s1 = inlined_call_operand.<no memory space> [shape: f32[1], index: 1, kind: input, shape index: {}]
  %s2 = inlined_call_operand.vmem [shape: f32[4,128], index: 2, kind: input, shape index: {}]
  %s3 = inlined_call_operand.hbm [shape: f32[4,128], index: 3, kind: output, shape index: {}]
  %s4 = sld [smem:[#allocation0]]
  $region22: #{tpu_custom_call.1} parent=0
    _
  %s6 = ssub.s32 1, %s4
  %s7 = scalar_select 0, %s6, %s4
  %8 = sst [smem:[#allocation2]] %s0
  %9 = sst [smem:[#allocation3]] %s1
  $region1: #{tpu_custom_call.1} parent=0
    #allocation4 [shape = 'u8[2048]{0}', space=vmem, size = 0x800, scoped, tag = 'output window, operand 0, single buffered']
    #allocation5 [shape = 's32[1]{0}', space=sflag, size = 0x4, scoped, tag = 'scoped memory for tpu_custom_call.1']
    %10 = vsyncpa [#allocation5], 0
    // Predicated region
    $region2: #{tpu_custom_call.1} parent=1 // pred_check
      _
    $region3: #{tpu_custom_call.1} parent=1 // pred_check_branch
      %12 = sbr.rel (0) target = $region5
    $region4: #{tpu_custom_call.1} parent=1 // pred_region
      _
    $region5: #{tpu_custom_call.1} parent=1 // pred_fallthru
      _
    // Predicated region
    $region6: #{tpu_custom_call.1} parent=1 // pred_check
      _
    $region7: #{tpu_custom_call.1} parent=1 // pred_check_branch
      %14 = sbr.rel (0) target = $region9
    $region8: #{tpu_custom_call.1} parent=1 // pred_region
      _
    $region9: #{tpu_custom_call.1} parent=1 // pred_fallthru
      _
    // Predicated region
    $region10: #{tpu_custom_call.1} parent=1 // pred_check
      _
    $region11: #{tpu_custom_call.1} parent=1 // pred_check_branch
      %16 = sbr.rel (0) target = $region13
    $region12: #{tpu_custom_call.1} parent=1 // pred_region
      _
    $region13: #{tpu_custom_call.1} parent=1 // pred_fallthru
      _
    %v17 = vld [vmem:[%s2] sm:$0xf]
    %s18 = sld [smem:[#allocation2]]
    %s19 = sld [smem:[#allocation3]]
    %vm20 = vcmask 257024
    %v21 = vsel %vm20, %v17, 0.0
    %22 = vadd.xlane.f32.xlu0 %v21
    %v23 = vpop.xlane.xlu0 %22
    %v24 = vrcp.pop 32.0
    %v25 = vmul.f32 %v23, %v24
    %v26 = vsub.f32 %v17, %v25
    %v27 = vmul.f32 %v26, %v26
    %v28 = vsel %vm20, %v27, 0.0
    %29 = vadd.xlane.f32.xlu0 %v28
    %v30 = vpop.xlane.xlu0 %29
    %v31 = vmul.f32 %v30, 0.032258064
    %v32 = vrsqrt.pop %v31
    %v33 = vmul.f32 %v31, %v32
    %vm34 = vcmp.eq.f32.partialorder %v31, inf
    %v35 = vsel %vm34, %v31, %v33
    %vm36 = vcmp.eq.f32.partialorder %v31, 0.0
    %v37 = vand.u32 %v31, 2147483648
    %v38 = vsel %vm36, %v37, %v35
    %v39 = vadd.f32 %v38, 1e-06
    %v40 = vstv %s18
    %v41 = vrcp.pop %v39
    %v42 = vmul.f32 %v40, %v41
    %v43 = vmul.f32 %v26, %v42
    %v44 = vstv %s19
    %v45 = vadd.f32 %v43, %v44
    %47 = vrot.lane.b32.xlu0 %v17, 96
    %v48 = vpop.permute.xlu0 %47
    %v50 = vsel %vm20, %v48, 0.0
    %51 = vadd.xlane.f32.xlu0 %v50
    %v52 = vpop.xlane.xlu0 %51
    %v53 = vmul.f32 %v52, %v24
    %v54 = vsub.f32 %v17, %v53
    %v55 = vmul.f32 %v54, %v54
    %57 = vrot.lane.b32.xlu0 %v55, 96
    %v58 = vpop.permute.xlu0 %57
    %v60 = vsel %vm20, %v58, 0.0
    %61 = vadd.xlane.f32.xlu0 %v60
    %v62 = vpop.xlane.xlu0 %61
    %v63 = vmul.f32 %v62, 0.032258064
    %v64 = vrsqrt.pop %v63
    %v65 = vmul.f32 %v63, %v64
    %vm66 = vcmp.eq.f32.partialorder %v63, inf
    %v67 = vsel %vm66, %v63, %v65
    %vm68 = vcmp.eq.f32.partialorder %v63, 0.0
    %v69 = vand.u32 %v63, 2147483648
    %v70 = vsel %vm68, %v69, %v67
    %v71 = vadd.f32 %v70, 1e-06
    %v72 = vrcp.pop %v71
    %v73 = vmul.f32 %v40, %v72
    %v74 = vmul.f32 %v54, %v73
    %v75 = vadd.f32 %v74, %v44
    %76 = vrot.lane.b32.xlu0 %v17, 64
    %v77 = vpop.permute.xlu0 %76
    %v79 = vsel %vm20, %v77, 0.0
    %80 = vadd.xlane.f32.xlu0 %v79
    %v81 = vpop.xlane.xlu0 %80
    %v82 = vmul.f32 %v81, %v24
    %v83 = vsub.f32 %v17, %v82
    %v84 = vmul.f32 %v83, %v83
    %86 = vrot.lane.b32.xlu0 %v84, 64
    %v87 = vpop.permute.xlu0 %86
    %v89 = vsel %vm20, %v87, 0.0
    %90 = vadd.xlane.f32.xlu0 %v89
    %v91 = vpop.xlane.xlu0 %90
    %v92 = vmul.f32 %v91, 0.032258064
    %v93 = vrsqrt.pop %v92
    %v94 = vmul.f32 %v92, %v93
    %vm95 = vcmp.eq.f32.partialorder %v92, inf
    %v96 = vsel %vm95, %v92, %v94
    %vm97 = vcmp.eq.f32.partialorder %v92, 0.0
    %v98 = vand.u32 %v92, 2147483648
    %v99 = vsel %vm97, %v98, %v96
    %v100 = vadd.f32 %v99, 1e-06
    %v101 = vrcp.pop %v100
    %v102 = vmul.f32 %v40, %v101
    %v103 = vmul.f32 %v83, %v102
    %v104 = vadd.f32 %v103, %v44
    %105 = vrot.lane.b32.xlu0 %v17, 32
    %v106 = vpop.permute.xlu0 %105
    %v108 = vsel %vm20, %v106, 0.0
    %109 = vadd.xlane.f32.xlu0 %v108
    %v110 = vpop.xlane.xlu0 %109
    %v111 = vmul.f32 %v110, %v24
    %v112 = vsub.f32 %v17, %v111
    %v113 = vmul.f32 %v112, %v112
    %115 = vrot.lane.b32.xlu0 %v113, 32
    %v116 = vpop.permute.xlu0 %115
    %v118 = vsel %vm20, %v116, 0.0
    %119 = vadd.xlane.f32.xlu0 %v118
    %v120 = vpop.xlane.xlu0 %119
    %v121 = vmul.f32 %v120, 0.032258064
    %v122 = vrsqrt.pop %v121
    %v123 = vmul.f32 %v121, %v122
    %vm124 = vcmp.eq.f32.partialorder %v121, inf
    %v125 = vsel %vm124, %v121, %v123
    %vm126 = vcmp.eq.f32.partialorder %v121, 0.0
    %v127 = vand.u32 %v121, 2147483648
    %v128 = vsel %vm126, %v127, %v125
    %v129 = vadd.f32 %v128, 1e-06
    %v130 = vrcp.pop %v129
    %v131 = vmul.f32 %v40, %v130
    %v132 = vmul.f32 %v112, %v131
    %v133 = vadd.f32 %v132, %v44
    %vm134 = vcmask 261120
    %v135 = vsel %vm134, %v45, %v75
    %vm136 = vcmask 523264
    %v137 = vsel %vm136, %v135, %v104
    %vm138 = vcmask 785408
    %v139 = vsel %vm138, %v137, %v133
    %140 = vst [vmem:[#allocation4] sm:$0xf] %v139
    // Predicated region
    $region14: #{tpu_custom_call.1} parent=1 // pred_check
      _
    $region15: #{tpu_custom_call.1} parent=1 // pred_check_branch
      %142 = sbr.rel (0) target = $region17
    $region16: #{tpu_custom_call.1} parent=1 // pred_region
      %s144 = ssub.s32 64, 64
      %145 = vsyncadd [#allocation5], %s144
      %s147 = sshll.u32 [#allocation4], 4
      %s148 = int_to_ptr.vmem [resolvable:$true] %s147
      %150 = dma.vmem_to_hbm [thread:$0]  %s148, 64, %s3, [#allocation5]
    $region17: #{tpu_custom_call.1} parent=1 // pred_fallthru
      _
    // Predicated region
    $region18: #{tpu_custom_call.1} parent=1 // pred_check
      _
    $region19: #{tpu_custom_call.1} parent=1 // pred_check_branch
      %152 = sbr.rel (0) target = $region21
    $region20: #{tpu_custom_call.1} parent=1 // pred_region
      %153 = dma.done [#allocation5], 64
    $region21: #{tpu_custom_call.1} parent=1 // pred_fallthru
      _
    %154 = vsyncpa [#allocation5], 1

</llo_original>
